<compile_context>
chip_gen: v7x
topology: tpu7x:2x2x1
jax: 0.10.0
libtpu: 0.0.40
codegen_flags: <defaults>
</compile_context>

<pallas_src>
import functools

import jax
import jax.numpy as jnp
import numpy as np
from jax import lax
from jax.experimental import pallas as pl
from jax.experimental.pallas import tpu as pltpu


def _mix32(x):
    """Trimmed (1-round) integer finalizer: uint32 -> mixed uint32."""
    x = x ^ (x >> 16)
    x = x * jnp.uint32(0x7FEB352D)
    x = x ^ (x >> 15)
    return x


def _pe_dropout_kernel(seed_ref, x_ref, pe_ref, o_ref, *,
                       p, training, tb, tc, total_cols, use_hw_prng):
    # x_ref: (tb, tc), pe_ref: (1, tc) -- broadcasts over rows (2-D broadcast).
    out = x_ref[...] + pe_ref[...]
    if training and p > 0.0:
        j = pl.program_id(0)   # column-tile index (outer grid axis)
        i = pl.program_id(1)   # row-tile index    (inner grid axis)
        scale = jnp.float32(1.0 / (1.0 - p))
        thr = jnp.uint32(min(int(round(p * 2.0 ** 32)), 2 ** 32 - 1))
        if use_hw_prng:
            # Hardware PRNG: one cheap per-tile seed, bits generated off the
            # VALU slot (which is near-binding on v6e/v7x for this HBM stream).
            tile_id = j * pl.num_programs(1) + i
            pltpu.prng_seed(seed_ref[0], tile_id)
            bits = pltpu.prng_random_bits((tb, tc))
            if bits.dtype != jnp.uint32:
                bits = pltpu.bitcast(bits, jnp.uint32)
        else:
            # Portable counter-based hash fallback (non-TPU backends).
            shp = (tb, tc)
            base = (jnp.uint32(i) * jnp.uint32(tb) * jnp.uint32(total_cols)
                    + jnp.uint32(j) * jnp.uint32(tc)
                    + seed_ref[0].astype(jnp.uint32) * jnp.uint32(0x9E3779B9))
            rows = lax.broadcasted_iota(jnp.uint32, shp, 0) * jnp.uint32(total_cols)
            cols = lax.broadcasted_iota(jnp.uint32, shp, 1)
            bits = _mix32(rows + cols + base)
        keep = (bits >= thr).astype(jnp.float32) * scale   # P(drop) ~= p
        out = out * keep
    o_ref[...] = out.astype(o_ref.dtype)


def _choose_tiles(rows, total_cols, device_kind):
    # Row tile: multiple of 8 (or the full, tiny batch); prefer >=2 row tiles
    # so both v7x TensorCores get work along a "parallel" axis.
    if rows <= 8:
        tb = rows
    else:
        tb = min(256, max(8, ((rows // 2) // 8) * 8))
    # Column tile: lane-dense (multiple of 128), generation-aware cap so the
    # double-buffered resident footprint (x + out + pe, 2 buffers each) stays
    # ~33 MiB on 128-MiB-VMEM v5e/v6e and ~17 MiB on 64-MiB-VMEM v7x.
    big_vmem = ("v5" in device_kind) or ("v6" in device_kind)
    col_cap = 8192 if big_vmem else 4096
    budget_bytes = (16 if big_vmem else 8) * 1024 * 1024
    budget_cols = max(128, budget_bytes // (4 * max(tb, 1)))
    tc = min(total_cols, col_cap, budget_cols)
    if tc < total_cols:
        tc = max(128, (tc // 128) * 128)
    return tb, tc


def positional_encoding_forward(x, pe, seed, *, dropout_p=0.1, training=True):
    """x: (B, S, E) f32, pe: (S, E) f32, seed: (1,) int32."""
    B, S, E = x.shape
    assert pe.shape == (S, E)
    SE = S * E

    if SE >= 128 or B == 1:
        rows, cols = B, SE
        x2 = x.reshape(rows, cols)          # contiguous reshape: free
        pe2 = pe.reshape(1, SE)
    else:
        # S*E below a lane (128): fold batch into the lane axis too so the
        # output last dim stays lane-dense (no masked vst.msk partial stores).
        rows, cols = 1, B * SE
        x2 = x.reshape(1, cols)
        pe2 = jnp.broadcast_to(pe.reshape(1, SE), (B, SE)).reshape(1, cols)

    try:
        device_kind = jax.devices()[0].device_kind.lower()
    except Exception:  # pragma: no cover
        device_kind = ""
    use_hw_prng = jax.default_backend() == "tpu"
    if not use_hw_prng:
        assert rows * cols < 2 ** 32, "hash-fallback dropout index would wrap"

    tb, tc = _choose_tiles(rows, cols, device_kind)
    # Column axis outermost: pe's block index only depends on the outer axis,
    # so its DMA is skipped across consecutive (inner, row-tile) steps.
    grid = (pl.cdiv(cols, tc), pl.cdiv(rows, tb))

    kernel = functools.partial(
        _pe_dropout_kernel, p=float(dropout_p), training=bool(training),
        tb=tb, tc=tc, total_cols=cols, use_hw_prng=use_hw_prng)

    big_vmem = ("v5" in device_kind) or ("v6" in device_kind)
    vmem_limit = (64 if big_vmem else 48) * 1024 * 1024

    out2 = pl.pallas_call(
        kernel,
        out_shape=jax.ShapeDtypeStruct((rows, cols), x.dtype),
        grid_spec=pltpu.PrefetchScalarGridSpec(
            num_scalar_prefetch=1,
            grid=grid,
            in_specs=[
                pl.BlockSpec((tb, tc), lambda j, i, s_ref: (i, j)),
                pl.BlockSpec((1, tc), lambda j, i, s_ref: (0, j)),
            ],
            out_specs=pl.BlockSpec((tb, tc), lambda j, i, s_ref: (i, j)),
        ),
        compiler_params=pltpu.CompilerParams(
            dimension_semantics=("parallel", "parallel"),
            vmem_limit_bytes=vmem_limit),
    )(seed, x2, pe2)
    return out2.reshape(B, S, E)


def make_positional_encoding_table(pad_size, embed):
    """Exactly mirrors the PyTorch __init__ construction of self.pe."""
    pos = np.arange(pad_size, dtype=np.float64)[:, None]
    i = np.arange(embed, dtype=np.float64)[None, :]
    angle = pos / np.power(10000.0, (np.floor(i / 2.0) * 2.0) / embed)
    pe = np.empty((pad_size, embed), dtype=np.float32)
    pe[:, 0::2] = np.sin(angle[:, 0::2])
    pe[:, 1::2] = np.cos(angle[:, 1::2])
    return jnp.asarray(pe)


if __name__ == "__main__":
    # small shapes: batch=2, pad_size(seq)=8, embed=32
    B, S, E = 2, 8, 32
    dropout_p = 0.1

    key = jax.random.PRNGKey(0)
    x = jax.random.normal(key, (B, S, E), dtype=jnp.float32)
    pe = make_positional_encoding_table(S, E)
    seed = jnp.array([0], dtype=jnp.int32)

    # Eval mode (dropout is identity) -- bit-exact vs reference.
    out_eval = positional_encoding_forward(
        x, pe, seed, dropout_p=dropout_p, training=False)
    jax.block_until_ready(out_eval)
    ref = np.asarray(x) + np.asarray(pe)[None, :, :]
    np.testing.assert_allclose(np.asarray(out_eval), ref, rtol=1e-6, atol=1e-6)

    # Training mode (dropout active). Kept elements must equal ref / (1 - p).
    out_train = positional_encoding_forward(
        x, pe, seed, dropout_p=dropout_p, training=True)
    jax.block_until_ready(out_train)
    ot = np.asarray(out_train)
    kept = ot != 0.0   # demo-only check: genuine zeros of x+pe would be misread
    np.testing.assert_allclose(ot[kept], (ref / (1.0 - dropout_p))[kept],
                               rtol=1e-5, atol=1e-5)
    drop_frac = 1.0 - kept.mean()
    assert 0.0 <= drop_frac <= 0.3, f"unexpected dropout fraction {drop_frac}"

    print("KERNEL_OK")
</pallas_src>

<mosaic_0001>
module attributes {stable_mosaic.version = 11 : i64} {
  func.func @_pe_dropout_kernel(%arg0: i32, %arg1: i32, %arg2: memref<1xi32, #tpu.memory_space<smem>>, %arg3: memref<2x256xf32, #tpu.memory_space<vmem>>, %arg4: memref<1x256xf32, #tpu.memory_space<vmem>>, %arg5: memref<2x256xf32, #tpu.memory_space<vmem>>) attributes {dimension_semantics = [#tpu.dimension_semantics<parallel>, #tpu.dimension_semantics<parallel>], iteration_bounds = array<i64: 1, 1>, scalar_prefetch = 1 : i64, scratch_operands = 0 : i64, tpu.core_type = #tpu.core_type<tc>, window_params = [{transform_indices = @transform_0, window_bounds = array<i64: 2, 256>}, {transform_indices = @transform_1, window_bounds = array<i64: 1, 256>}, {transform_indices = @transform_2, window_bounds = array<i64: 2, 256>}]} {
    %c0 = arith.constant 0 : index
    %c0_0 = arith.constant 0 : index
    %0 = vector.load %arg3[%c0, %c0_0] : memref<2x256xf32, #tpu.memory_space<vmem>>, vector<2x256xf32>
    %c0_1 = arith.constant 0 : index
    %c0_2 = arith.constant 0 : index
    %1 = vector.load %arg4[%c0_1, %c0_2] : memref<1x256xf32, #tpu.memory_space<vmem>>, vector<1x256xf32>
    %2 = vector.broadcast %1 : vector<1x256xf32> to vector<2x256xf32>
    %3 = arith.addf %0, %2 : vector<2x256xf32>
    %c0_3 = arith.constant 0 : index
    %c0_4 = arith.constant 0 : index
    %4 = vector.load %arg5[%c0_3, %c0_4] : memref<2x256xf32, #tpu.memory_space<vmem>>, vector<2x256xf32>
    tpu.vector_store %arg5[%c0_3, %c0_4], %3 {strides = array<i32>} : memref<2x256xf32, #tpu.memory_space<vmem>>, vector<2x256xf32>,
    return
  }
  func.func @transform_0(%arg0: i32, %arg1: i32, %arg2: memref<1xi32, #tpu.memory_space<smem>>) -> (i32, i32) {
    %c0_i32 = arith.constant 0 : i32
    return %arg1, %arg0 : i32, i32
  }
  func.func @transform_1(%arg0: i32, %arg1: i32, %arg2: memref<1xi32, #tpu.memory_space<smem>>) -> (i32, i32) {
    %c0_i32 = arith.constant 0 : i32
    %c0_i32_0 = arith.constant 0 : i32
    return %c0_i32, %arg0 : i32, i32
  }
  func.func @transform_2(%arg0: i32, %arg1: i32, %arg2: memref<1xi32, #tpu.memory_space<smem>>) -> (i32, i32) {
    %c0_i32 = arith.constant 0 : i32
    return %arg1, %arg0 : i32, i32
  }
}

</mosaic_0001>

<llo_original>
// kernel: tpu_custom_call.1
$region0: #{tpu_custom_call.1}
  #allocation0 [shape = 'u32[]', space=smem, size = 0x4, offset = 0x4, fixed_abs, tag = 'smem constant byte address 0x4 - core index']
  #allocation1 [shape = 'u32[144,128]{1,0:T(1,128)}', space=vmem, size = 0x12000, scoped, tag = 'internal scratch']
  #allocation2 [shape = 's32[1]{0}', space=sflag, size = 0x4, scoped, tag = 'scoped memory for tpu_custom_call.1']
  #allocation3 [shape = 's32[1]{0:T(128)S(6)}', space=smem, size = 0x200, scoped, tag = 'prefetched SMEM operand 0']
  %s0 = inlined_call_operand.<no memory space> [shape: s32[1], index: 0, kind: input, shape index: {}]
  %s1 = inlined_call_operand.hbm [shape: f32[2,256], index: 1, kind: input, shape index: {}]
  %s2 = inlined_call_operand.vmem [shape: f32[1,256], index: 2, kind: input, shape index: {}]
  %s3 = inlined_call_operand.hbm [shape: f32[2,256], index: 3, kind: output, shape index: {}]
  %s4 = sld [smem:[#allocation0]]
  $region22: #{tpu_custom_call.1} parent=0
    _
  %s6 = ssub.s32 1, %s4
  %s7 = scalar_select 0, %s6, %s4
  %8 = sst [smem:[#allocation3]] %s0
  $region1: #{tpu_custom_call.1} parent=0
    #allocation4 [shape = 'u8[2048]{0}', space=vmem, size = 0x800, scoped, tag = 'input window, operand 1, single buffered']
    #allocation5 [shape = 's32[1]{0}', space=sflag, size = 0x4, scoped, tag = 'scoped memory for tpu_custom_call.1']
    #allocation6 [shape = 's32[1]{0}', space=sflag, size = 0x4, scoped, tag = 'scoped memory for tpu_custom_call.1']
    #allocation7 [shape = 'u8[2048]{0}', space=vmem, size = 0x800, scoped, tag = 'output window, operand 0, single buffered']
    %9 = vsyncpa [#allocation5], 0
    %10 = vsyncpa [#allocation6], 0
    // Predicated region
    $region2: #{tpu_custom_call.1} parent=1 // pred_check
      _
    $region3: #{tpu_custom_call.1} parent=1 // pred_check_branch
      %12 = sbr.rel (0) target = $region5
    $region4: #{tpu_custom_call.1} parent=1 // pred_region
      %s14 = ssub.s32 64, 64
      %15 = vsyncadd [#allocation5], %s14
      %s17 = sshll.u32 [#allocation4], 4
      %s18 = int_to_ptr.vmem [resolvable:$true] %s17
      %20 = dma.hbm_to_vmem [thread:$0]  %s1, 64, %s18, [#allocation5]
    $region5: #{tpu_custom_call.1} parent=1 // pred_fallthru
      _
    // Predicated region
    $region6: #{tpu_custom_call.1} parent=1 // pred_check
      _
    $region7: #{tpu_custom_call.1} parent=1 // pred_check_branch
      %22 = sbr.rel (0) target = $region9
    $region8: #{tpu_custom_call.1} parent=1 // pred_region
      _
    $region9: #{tpu_custom_call.1} parent=1 // pred_fallthru
      _
    // Predicated region
    $region10: #{tpu_custom_call.1} parent=1 // pred_check
      _
    $region11: #{tpu_custom_call.1} parent=1 // pred_check_branch
      %24 = sbr.rel (0) target = $region13
    $region12: #{tpu_custom_call.1} parent=1 // pred_region
      %25 = dma.done [#allocation5], 64
    $region13: #{tpu_custom_call.1} parent=1 // pred_fallthru
      _
    %v26 = vld [vmem:[#allocation4] sm:$0xf]
    %v27 = vld [vmem:[%s2] sm:$0x3]
    %v29 = vlaneseq
    %v30 = vshrl.u32 %v29, 7
    %v31 = vsub.s32 0, %v30
    %v32 = vrot.slane %v27, %v31
    %v33 = vlaneseq
    %v34 = vshrl.u32 %v33, 7
    %v35 = vsub.s32 1, %v34
    %v36 = vrot.slane %v27, %v35
    %v37 = vcombine.low %v32, %v36
    %v39 = vunpack.c.l.s4 1983009808
    %v40 = vunpack.c.0.s8 %v39
    %v41 = vlaneseq
    %v42 = vshrl.u32 %v41, 7
    %v43 = vsub.s32 %v40, %v42
    %v44 = vrot.slane %v37, %v43
    %v46 = vadd.f32 %v26, %v44
    %47 = vst [vmem:[#allocation7] sm:$0xf] %v46
    // Predicated region
    $region14: #{tpu_custom_call.1} parent=1 // pred_check
      _
    $region15: #{tpu_custom_call.1} parent=1 // pred_check_branch
      %49 = sbr.rel (0) target = $region17
    $region16: #{tpu_custom_call.1} parent=1 // pred_region
      %s51 = ssub.s32 64, 64
      %52 = vsyncadd [#allocation6], %s51
      %s54 = sshll.u32 [#allocation7], 4
      %s55 = int_to_ptr.vmem [resolvable:$true] %s54
      %57 = dma.vmem_to_hbm [thread:$0]  %s55, 64, %s3, [#allocation6]
    $region17: #{tpu_custom_call.1} parent=1 // pred_fallthru
      _
    // Predicated region
    $region18: #{tpu_custom_call.1} parent=1 // pred_check
      _
    $region19: #{tpu_custom_call.1} parent=1 // pred_check_branch
      %59 = sbr.rel (0) target = $region21
    $region20: #{tpu_custom_call.1} parent=1 // pred_region
      %60 = dma.done [#allocation6], 64
    $region21: #{tpu_custom_call.1} parent=1 // pred_fallthru
      _
    %61 = vsyncpa [#allocation5], 1
    %62 = vsyncpa [#allocation6], 1

</llo_original>
